<compile_context>
chip_gen: v7x
topology: tpu7x:2x2x1
jax: 0.10.0
libtpu: 0.0.40
codegen_flags: <defaults>
</compile_context>

<pallas_src>
import jax
import jax.numpy as jnp
from jax.experimental import pallas as pl
from jax.experimental.pallas import tpu as pltpu


def _pooler_kernel(x_ref, w_ref, b_ref, o_ref):
    # x_ref: (Bp, H)   bf16 first-token activations (resident, same block each step)
    # w_ref: (H, TN)   bf16 weight tile, [in, out] layout
    # b_ref: (1, TN)   bf16 bias tile
    # o_ref: (Bp, TN)  output tile (original activation dtype)
    y = jnp.dot(x_ref[...], w_ref[...], preferred_element_type=jnp.float32)
    y = y + b_ref[...].astype(jnp.float32)          # add in f32
    o_ref[...] = jnp.tanh(y).astype(o_ref.dtype)    # tanh in f32 (EUP)


def _round_up(x, m):
    return ((x + m - 1) // m) * m


def _pick_tile_n(hp, h_in, b, *, w_itemsize, x_itemsize, out_itemsize,
                 vmem_budget_bytes, max_tile=512):
    """Largest TN (multiple of 128) dividing hp//2 that fits the VMEM budget.

    `hp` is the padded output-hidden size (multiple of 256), so hp // tn is
    always even and >= 2: both v7x TensorCores stream the same number of
    weight bytes, and every tile is lane-dense.
    """
    half = hp // 2
    tn = min(max_tile, half)
    tn -= tn % 128
    while tn >= 128:
        if half % tn == 0:
            vmem = (3 * h_in * tn * w_itemsize      # weight tile (<= 3-deep pipeline)
                    + 2 * tn * w_itemsize           # bias tile (double-buffered)
                    + 2 * b * tn * out_itemsize     # output tile (double-buffered)
                    + b * h_in * x_itemsize)        # resident activations (1x)
            if vmem <= vmem_budget_bytes:
                return tn
        tn -= 128
    # Minimum lane-dense tile; vmem_limit_bytes below still leaves headroom.
    return 128


def _pooler_call(x_bf, w_bf, b2d, *, Bp, H, Hp, tn, grid_n, w_depth,
                 out_dtype, vmem_limit, cost, use_pipeline_mode):
    if use_pipeline_mode:
        x_spec = pl.BlockSpec((Bp, H), lambda j: (0, 0),
                              pipeline_mode=pl.Buffered(1))   # invariant block
        w_spec = pl.BlockSpec((H, tn), lambda j: (0, j),
                              pipeline_mode=pl.Buffered(w_depth))
    else:
        x_spec = pl.BlockSpec((Bp, H), lambda j: (0, 0))
        w_spec = pl.BlockSpec((H, tn), lambda j: (0, j))

    return pl.pallas_call(
        _pooler_kernel,
        out_shape=jax.ShapeDtypeStruct((Bp, Hp), out_dtype),
        grid_spec=pltpu.PrefetchScalarGridSpec(
            num_scalar_prefetch=0,
            grid=(grid_n,),
            in_specs=[
                x_spec,                                        # activations
                w_spec,                                        # weight column tile
                pl.BlockSpec((1, tn), lambda j: (0, j)),       # bias tile
            ],
            out_specs=pl.BlockSpec((Bp, tn), lambda j: (0, j)),
        ),
        compiler_params=pltpu.CompilerParams(
            # Independent output columns -> parallel (megacore split on v7x).
            dimension_semantics=("parallel",),
            vmem_limit_bytes=int(vmem_limit),
        ),
        cost_estimate=cost,
    )(x_bf, w_bf, b2d)


def qbert_pooler(hidden_states, weight, bias, *, max_tile_n=512):
    """hidden_states: [B, S, H]; weight: [H_in, H_out] (transpose of torch
    nn.Linear.weight); bias: [H_out]."""
    B, S, H = hidden_states.shape
    assert weight.shape == (H, H), "weight must be [H_in, H_out] (transposed torch layout)"
    assert bias.shape == (H,)

    # ---- generation-aware VMEM budget --------------------------------------
    try:
        vmem_cap = int(pltpu.get_tpu_info().vmem_capacity_bytes)
    except Exception:
        vmem_cap = 64 * 1024 * 1024        # v7x floor; safe on every generation
    vmem_budget = vmem_cap // 2            # tile-selection budget (headroom)
    vmem_limit = (vmem_cap * 3) // 4       # explicit scoped-VMEM limit

    # ---- wrapper-side layout prep -------------------------------------------
    # First-token slice hoisted out of the kernel: one contiguous [B, H] load.
    x = hidden_states[:, 0, :]

    # bf16 params/activations halve the HBM-bound weight stream; compute stays f32.
    w_bf = weight.astype(jnp.bfloat16)
    b_bf = bias.astype(jnp.bfloat16)
    x_bf = x.astype(jnp.bfloat16)

    # Pad batch to a full 8-row sublane group (unmasked vst, full MXU M dim).
    Bp = max(8, _round_up(B, 8))
    if Bp != B:
        x_bf = jnp.pad(x_bf, ((0, Bp - B), (0, 0)))

    # Pad output-hidden axis to a multiple of 256 so the weight-column grid is
    # always even (>= 2).  No-op for BERT sizes (768, 1024, ...).
    Hp = _round_up(H, 256)
    if Hp != H:
        w_bf = jnp.pad(w_bf, ((0, 0), (0, Hp - H)))
        b_bf = jnp.pad(b_bf, (0, Hp - H))
    b2d = b_bf.reshape(1, Hp)

    out_dtype = hidden_states.dtype
    out_bytes = jnp.dtype(out_dtype).itemsize
    tn = _pick_tile_n(Hp, H, Bp,
                      w_itemsize=2, x_itemsize=2, out_itemsize=out_bytes,
                      vmem_budget_bytes=vmem_budget, max_tile=max_tile_n)
    grid_n = Hp // tn                      # always even (>= 2)
    w_depth = 3 if grid_n >= 3 else 2      # deeper weight pipeline when many steps

    cost = pl.CostEstimate(
        flops=2 * Bp * H * Hp,
        transcendentals=Bp * Hp,
        bytes_accessed=(H * Hp * 2         # bf16 weight
                        + Hp * 2           # bf16 bias
                        + Bp * H * 2       # bf16 activations in
                        + Bp * Hp * out_bytes),  # pooled out
    )

    kwargs = dict(Bp=Bp, H=H, Hp=Hp, tn=tn, grid_n=grid_n, w_depth=w_depth,
                  out_dtype=out_dtype, vmem_limit=vmem_limit, cost=cost)
    try:
        out_full = _pooler_call(x_bf, w_bf, b2d, use_pipeline_mode=True, **kwargs)
    except Exception:
        # pipeline_mode hint rejected by this JAX build: fall back to the
        # default double-buffered pipeline (identical semantics).
        out_full = _pooler_call(x_bf, w_bf, b2d, use_pipeline_mode=False, **kwargs)

    return out_full[:B, :H]


def qbert_pooler_ref(hidden_states, weight, bias):
    first = hidden_states[:, 0]
    return jnp.tanh(first @ weight + bias)


if __name__ == "__main__":
    B, S, H = 2, 8, 32  # small shapes consistent with the module
    key = jax.random.PRNGKey(0)
    k_h, k_w, k_b = jax.random.split(key, 3)

    hidden_states = jax.random.normal(k_h, (B, S, H), dtype=jnp.float32)
    # Deterministic synthetic "Linear" parameters, [H_in, H_out] layout.
    weight = jax.random.normal(k_w, (H, H), dtype=jnp.float32) * (1.0 / jnp.sqrt(H))
    bias = jax.random.normal(k_b, (H,), dtype=jnp.float32) * 0.02

    out = qbert_pooler(hidden_states, weight, bias)
    out = jax.block_until_ready(out)

    ref = qbert_pooler_ref(hidden_states, weight, bias)
    assert out.shape == (B, H)
    # bf16 weights/activations -> loose tolerance vs the pure-f32 reference.
    err = float(jnp.max(jnp.abs(out - ref)))
    assert jnp.allclose(out, ref, atol=3e-2, rtol=3e-2), f"max err {err}"

    print("KERNEL_OK")
</pallas_src>

<mosaic_0001>
module attributes {stable_mosaic.version = 11 : i64} {
  func.func @_pooler_kernel(%arg0: i32, %arg1: memref<8x32xbf16, #tpu.memory_space<vmem>>, %arg2: memref<32x128xbf16, #tpu.memory_space<vmem>>, %arg3: memref<1x128xbf16, #tpu.memory_space<vmem>>, %arg4: memref<8x128xf32, #tpu.memory_space<vmem>>) attributes {dimension_semantics = [#tpu.dimension_semantics<parallel>], iteration_bounds = array<i64: 2>, scalar_prefetch = 0 : i64, scratch_operands = 0 : i64, tpu.core_type = #tpu.core_type<tc>, window_params = [{pipeline_mode = #tpu.pipeline_mode<synchronous>, transform_indices = @transform_0, window_bounds = array<i64: 8, 32>}, {pipeline_mode = #tpu.pipeline_mode<double_buffered>, transform_indices = @transform_1, window_bounds = array<i64: 32, 128>}, {transform_indices = @transform_2, window_bounds = array<i64: 1, 128>}, {transform_indices = @transform_3, window_bounds = array<i64: 8, 128>}]} {
    %c0 = arith.constant 0 : index
    %c0_0 = arith.constant 0 : index
    %0 = vector.load %arg1[%c0, %c0_0] : memref<8x32xbf16, #tpu.memory_space<vmem>>, vector<8x32xbf16>
    %c0_1 = arith.constant 0 : index
    %c0_2 = arith.constant 0 : index
    %1 = vector.load %arg2[%c0_1, %c0_2] : memref<32x128xbf16, #tpu.memory_space<vmem>>, vector<32x128xbf16>
    %cst = arith.constant dense<0.000000e+00> : vector<8x128xf32>
    %2 = tpu.matmul %0, %1, %cst {dimension_numbers = #tpu.dot_dimension_numbers<[1], [0], [0], [1], [0, 0, 1, 1], [], []>} : vector<8x32xbf16>, vector<32x128xbf16>, vector<8x128xf32> -> vector<8x128xf32>
    %c0_3 = arith.constant 0 : index
    %c0_4 = arith.constant 0 : index
    %3 = vector.load %arg3[%c0_3, %c0_4] : memref<1x128xbf16, #tpu.memory_space<vmem>>, vector<1x128xbf16>
    %4 = arith.extf %3 : vector<1x128xbf16> to vector<1x128xf32>
    %5 = vector.broadcast %4 : vector<1x128xf32> to vector<8x128xf32>
    %6 = arith.addf %2, %5 : vector<8x128xf32>
    %7 = math.tanh %6 : vector<8x128xf32>
    %c0_5 = arith.constant 0 : index
    %c0_6 = arith.constant 0 : index
    %8 = vector.load %arg4[%c0_5, %c0_6] : memref<8x128xf32, #tpu.memory_space<vmem>>, vector<8x128xf32>
    tpu.vector_store %arg4[%c0_5, %c0_6], %7 {strides = array<i32>} : memref<8x128xf32, #tpu.memory_space<vmem>>, vector<8x128xf32>,
    return
  }
  func.func @transform_0(%arg0: i32) -> (i32, i32) {
    %c0_i32 = arith.constant 0 : i32
    %c0_i32_0 = arith.constant 0 : i32
    %c0_i32_1 = arith.constant 0 : i32
    return %c0_i32, %c0_i32_0 : i32, i32
  }
  func.func @transform_1(%arg0: i32) -> (i32, i32) {
    %c0_i32 = arith.constant 0 : i32
    %c0_i32_0 = arith.constant 0 : i32
    return %c0_i32, %arg0 : i32, i32
  }
  func.func @transform_2(%arg0: i32) -> (i32, i32) {
    %c0_i32 = arith.constant 0 : i32
    %c0_i32_0 = arith.constant 0 : i32
    return %c0_i32, %arg0 : i32, i32
  }
  func.func @transform_3(%arg0: i32) -> (i32, i32) {
    %c0_i32 = arith.constant 0 : i32
    %c0_i32_0 = arith.constant 0 : i32
    return %c0_i32, %arg0 : i32, i32
  }
}

module attributes {stable_mosaic.version = 11 : i64} {
  func.func @_pooler_kernel(%arg0: i32, %arg1: memref<8x32xbf16, #tpu.memory_space<vmem>>, %arg2: memref<32x128xbf16, #tpu.memory_space<vmem>>, %arg3: memref<1x128xbf16, #tpu.memory_space<vmem>>, %arg4: memref<8x128xf32, #tpu.memory_space<vmem>>) attributes {dimension_semantics = [#tpu.dimension_semantics<parallel>], iteration_bounds = array<i64: 2>, scalar_prefetch = 0 : i64, scratch_operands = 0 : i64, tpu.core_type = #tpu.core_type<tc>, window_params = [{pipeline_mode = #tpu.pipeline_mode<synchronous>, transform_indices = @transform_0, window_bounds = array<i64: 8, 32>}, {transform_indices = @transform_1, window_bounds = array<i64: 32, 128>}, {transform_indices = @transform_2, window_bounds = array<i64: 1, 128>}, {transform_indices = @transform_3, window_bounds = array<i64: 8, 128>}]} {
    %c0 = arith.constant 0 : index
    %c0_0 = arith.constant 0 : index
    %0 = vector.load %arg1[%c0, %c0_0] : memref<8x32xbf16, #tpu.memory_space<vmem>>, vector<8x32xbf16>
    %c0_1 = arith.constant 0 : index
    %c0_2 = arith.constant 0 : index
    %1 = vector.load %arg2[%c0_1, %c0_2] : memref<32x128xbf16, #tpu.memory_space<vmem>>, vector<32x128xbf16>
    %cst = arith.constant dense<0.000000e+00> : vector<8x128xf32>
    %2 = tpu.matmul %0, %1, %cst {dimension_numbers = #tpu.dot_dimension_numbers<[1], [0], [0], [1], [0, 0, 1, 1], [], []>} : vector<8x32xbf16>, vector<32x128xbf16>, vector<8x128xf32> -> vector<8x128xf32>
    %c0_3 = arith.constant 0 : index
    %c0_4 = arith.constant 0 : index
    %3 = vector.load %arg3[%c0_3, %c0_4] : memref<1x128xbf16, #tpu.memory_space<vmem>>, vector<1x128xbf16>
    %4 = arith.extf %3 : vector<1x128xbf16> to vector<1x128xf32>
    %5 = vector.broadcast %4 : vector<1x128xf32> to vector<8x128xf32>
    %6 = arith.addf %2, %5 : vector<8x128xf32>
    %7 = math.tanh %6 : vector<8x128xf32>
    %c0_5 = arith.constant 0 : index
    %c0_6 = arith.constant 0 : index
    %8 = vector.load %arg4[%c0_5, %c0_6] : memref<8x128xf32, #tpu.memory_space<vmem>>, vector<8x128xf32>
    tpu.vector_store %arg4[%c0_5, %c0_6], %7 {strides = array<i32>} : memref<8x128xf32, #tpu.memory_space<vmem>>, vector<8x128xf32>,
    return
  }
  func.func @transform_0(%arg0: i32) -> (i32, i32) {
    %c0_i32 = arith.constant 0 : i32
    %c0_i32_0 = arith.constant 0 : i32
    %c0_i32_1 = arith.constant 0 : i32
    return %c0_i32, %c0_i32_0 : i32, i32
  }
  func.func @transform_1(%arg0: i32) -> (i32, i32) {
    %c0_i32 = arith.constant 0 : i32
    %c0_i32_0 = arith.constant 0 : i32
    return %c0_i32, %arg0 : i32, i32
  }
  func.func @transform_2(%arg0: i32) -> (i32, i32) {
    %c0_i32 = arith.constant 0 : i32
    %c0_i32_0 = arith.constant 0 : i32
    return %c0_i32, %arg0 : i32, i32
  }
  func.func @transform_3(%arg0: i32) -> (i32, i32) {
    %c0_i32 = arith.constant 0 : i32
    %c0_i32_0 = arith.constant 0 : i32
    return %c0_i32, %arg0 : i32, i32
  }
}

</mosaic_0001>

<llo_original>
// kernel: tpu_custom_call.1
$region0: #{tpu_custom_call.1}
  #allocation0 [shape = 'u32[]', space=smem, size = 0x4, offset = 0x4, fixed_abs, tag = 'smem constant byte address 0x4 - core index']
  #allocation1 [shape = 'u32[144,128]{1,0:T(1,128)}', space=vmem, size = 0x12000, scoped, tag = 'internal scratch']
  %s0 = inlined_call_operand.hbm [shape: bf16[8,32], index: 0, kind: input, shape index: {}]
  %s1 = inlined_call_operand.hbm [shape: bf16[32,256], index: 1, kind: input, shape index: {}]
  %s2 = inlined_call_operand.vmem [shape: bf16[1,256], index: 2, kind: input, shape index: {}]
  %s3 = inlined_call_operand.hbm [shape: f32[8,256], index: 3, kind: output, shape index: {}]
  %s4 = sld [smem:[#allocation0]]
  $region53: #{tpu_custom_call.1} parent=0
    _
  %s6 = ssub.s32 1, %s4
  %s7 = scalar_select 0, %s6, %s4
  $region1: #{tpu_custom_call.1} parent=0
    #allocation2 [shape = 'u8[2048]{0}', space=vmem, size = 0x800, scoped, tag = 'input window, operand 0, single buffered']
    #allocation3 [shape = 's32[2]{0}', space=sflag, size = 0x8, scoped, tag = 'scoped memory for tpu_custom_call.1']
    #allocation4 [shape = 's32[2]{0}', space=sflag, size = 0x8, scoped, tag = 'scoped memory for tpu_custom_call.1']
    #allocation5 [shape = 'u8[16384]{0}', space=vmem, size = 0x4000, scoped, tag = 'input window, operand 1']
    #allocation6 [shape = 's32[2]{0}', space=sflag, size = 0x8, scoped, tag = 'scoped memory for tpu_custom_call.1']
    #allocation7 [shape = 'u8[8192]{0}', space=vmem, size = 0x2000, scoped, tag = 'output window, operand 0']
    %8 = vsyncpa [#allocation3], 0
    %9 = vsyncpa [#allocation6], 0
    %s10 = scalar_lea.sflag [#allocation6], 1
    %11 = vsyncpa %s10, 0
    %12 = vsyncpa [#allocation4], 0
    %s13 = scalar_lea.sflag [#allocation4], 1
    %14 = vsyncpa %s13, 0
    loop: start=0, step=1, limit=4
    $region2: #{tpu_custom_call.1} parent=1 // loop_pre_header
      _
    $region3: #{tpu_custom_call.1} parent=1 // loop_header
      %s16 = sphi 0, %s20
      %p17 = scmp.ge.s32.totalorder %s16, 4
      %s24 = sphi 0, %s24
      %s26 = sphi 0, %s24
      %s27 = sphi 0, %s26
      %s41 = sphi 0, %s27
      %s47 = sphi 0, %s49
      %s50 = sphi 0, %s47
      %s51 = sphi 0, %s50
      %s67 = sphi 0, %s51
      %s73 = sphi 0, %s75
      %s76 = sphi 0, %s73
      %s77 = sphi 0, %s76
      %s93 = sphi 0, %s77
      %s99 = sphi 0, %s101
      %s102 = sphi 0, %s99
      %s103 = sphi 0, %s102
      %s119 = sphi 0, %s103
    $region4: #{tpu_custom_call.1} parent=1 // loop_header_branch
      %19 = sbr.rel (%p17) target = $region8
    $region5: #{tpu_custom_call.1} parent=1 // loop_body
      %s21 = ssub.s32 %s16, 1
      %s22 = ssub.s32 %s16, 2
      %s23 = sadd.s32 %s16, 1
      %s25 = sadd.s32 %s24, 1
      %p28 = scmp.eq.s32.totalorder %s16, 1
      %p29 = scmp.ne.s32.totalorder %s24, %s26
      %p30 = scmp.eq.s32.totalorder %s16, 0
      %p31 = por %p29, %p30
      %p32 = scmp.ne.s32.totalorder %s24, %s26
      %p33 = scmp.eq.s32.totalorder %s21, 1
      %p34 = por %p32, %p33
      %p35 = scmp.ne.s32.totalorder %s26, %s27
      %p36 = scmp.eq.s32.totalorder %s21, 0
      %p37 = por %p35, %p36
      %p38 = scmp.ne.s32.totalorder %s26, %s27
      %p39 = scmp.eq.s32.totalorder %s22, 1
      %p40 = por %p38, %p39
      %p42 = scmp.ne.s32.totalorder %s27, %s41
      %p43 = scmp.eq.s32.totalorder %s22, 0
      %p44 = por %p42, %p43
      %s45 = ssub.s32 %s16, %s23
      %p46 = scmp.eq.s32.totalorder %s45, 0
      %s48 = sadd.s32 %s47, 1
      %s49 = scalar_select %p46, %s47, %s48
      %p52 = pneg %p46
      %p53 = scmp.eq.s32.totalorder %s16, 1
      %p54 = por %p52, %p53
      %p55 = scmp.ne.s32.totalorder %s47, %s50
      %p56 = scmp.eq.s32.totalorder %s16, 0
      %p57 = por %p55, %p56
      %p58 = scmp.ne.s32.totalorder %s47, %s50
      %p59 = scmp.eq.s32.totalorder %s21, 1
      %p60 = por %p58, %p59
      %p61 = scmp.ne.s32.totalorder %s50, %s51
      %p62 = scmp.eq.s32.totalorder %s21, 0
      %p63 = por %p61, %p62
      %p64 = scmp.ne.s32.totalorder %s50, %s51
      %p65 = scmp.eq.s32.totalorder %s22, 1
      %p66 = por %p64, %p65
      %p68 = scmp.ne.s32.totalorder %s51, %s67
      %p69 = scmp.eq.s32.totalorder %s22, 0
      %p70 = por %p68, %p69
      %s71 = ssub.s32 %s16, %s23
      %p72 = scmp.eq.s32.totalorder %s71, 0
      %s74 = sadd.s32 %s73, 1
      %s75 = scalar_select %p72, %s73, %s74
      %p78 = pneg %p72
      %p79 = scmp.eq.s32.totalorder %s16, 1
      %p80 = por %p78, %p79
      %p81 = scmp.ne.s32.totalorder %s73, %s76
      %p82 = scmp.eq.s32.totalorder %s16, 0
      %p83 = por %p81, %p82
      %p84 = scmp.ne.s32.totalorder %s73, %s76
      %p85 = scmp.eq.s32.totalorder %s21, 1
      %p86 = por %p84, %p85
      %p87 = scmp.ne.s32.totalorder %s76, %s77
      %p88 = scmp.eq.s32.totalorder %s21, 0
      %p89 = por %p87, %p88
      %p90 = scmp.ne.s32.totalorder %s76, %s77
      %p91 = scmp.eq.s32.totalorder %s22, 1
      %p92 = por %p90, %p91
      %p94 = scmp.ne.s32.totalorder %s77, %s93
      %p95 = scmp.eq.s32.totalorder %s22, 0
      %p96 = por %p94, %p95
      %s97 = ssub.s32 %s16, %s23
      %p98 = scmp.eq.s32.totalorder %s97, 0
      %s100 = sadd.s32 %s99, 1
      %s101 = scalar_select %p98, %s99, %s100
      %p104 = pneg %p98
      %p105 = scmp.eq.s32.totalorder %s16, 1
      %p106 = por %p104, %p105
      %p107 = scmp.ne.s32.totalorder %s99, %s102
      %p108 = scmp.eq.s32.totalorder %s16, 0
      %p109 = por %p107, %p108
      %p110 = scmp.ne.s32.totalorder %s99, %s102
      %p111 = scmp.eq.s32.totalorder %s21, 1
      %p112 = por %p110, %p111
      %p113 = scmp.ne.s32.totalorder %s102, %s103
      %p114 = scmp.eq.s32.totalorder %s21, 0
      %p115 = por %p113, %p114
      %p116 = scmp.ne.s32.totalorder %s102, %s103
      %p117 = scmp.eq.s32.totalorder %s22, 1
      %p118 = por %p116, %p117
      %p120 = scmp.ne.s32.totalorder %s103, %s119
      %p121 = scmp.eq.s32.totalorder %s22, 0
      %p122 = por %p120, %p121
      %p123 = scmp.le.s32.totalorder 1, %s16
      %p124 = scmp.lt.s32.totalorder %s16, 3
      %p125 = pnand %p123, %p124
      %p126 = pneg %p125
      // Predicated region
      $region9: #{tpu_custom_call.1} parent=5 // pred_check
        _
      $region10: #{tpu_custom_call.1} parent=5 // pred_check_branch
        %128 = sbr.rel (%p125) target = $region12
      $region11: #{tpu_custom_call.1} parent=5 // pred_region
        %s129 = ssub.s32 %s16, 1
        // Predicated region
        $region13: #{tpu_custom_call.1} parent=11 // pred_check
          %p130 = pneg %p37
        $region14: #{tpu_custom_call.1} parent=11 // pred_check_branch
          %132 = sbr.rel (%p130) target = $region16
        $region15: #{tpu_custom_call.1} parent=11 // pred_region
          %s134 = ssub.s32 64, 64
          %135 = vsyncadd [#allocation3], %s134
          %s137 = sshll.u32 [#allocation2], 4
          %s138 = int_to_ptr.vmem [resolvable:$true] %s137
          %140 = dma.hbm_to_vmem [thread:$0]  %s0, 64, %s138, [#allocation3]
        $region16: #{tpu_custom_call.1} parent=11 // pred_fallthru
          _
      $region12: #{tpu_custom_call.1} parent=5 // pred_fallthru
        _
      %p141 = scmp.lt.s32.totalorder %s16, 2
      // Predicated region
      $region17: #{tpu_custom_call.1} parent=5 // pred_check
        %p142 = pneg %p141
      $region18: #{tpu_custom_call.1} parent=5 // pred_check_branch
        %144 = sbr.rel (%p142) target = $region20
      $region19: #{tpu_custom_call.1} parent=5 // pred_region
        // Predicated region
        $region21: #{tpu_custom_call.1} parent=19 // pred_check
          %p145 = pneg %p57
        $region22: #{tpu_custom_call.1} parent=19 // pred_check_branch
          %147 = sbr.rel (%p145) target = $region24
        $region23: #{tpu_custom_call.1} parent=19 // pred_region
          %s148 = sand.u32 %s47, 1
          %s149 = scalar_lea.sflag [#allocation6], %s148
          %s150 = sand.u32 %s47, 1
          %s151 = smul.addr %s150, 16
          %s152 = scalar_lea.vmem [#allocation5], %s151
          %s154 = ssub.s32 256, 256
          %155 = vsyncadd %s149, %s154
          %s156 = smul.addr %s16, 64
          %s157 = scalar_lea.hbm %s1, %s156
          %s158 = sshll.u32 %s152, 4
          %s159 = int_to_ptr.vmem [resolvable:$true] %s158
          %164 = dma.hbm_to_vmem [thread:$0]  %s157, 256, %s159, %s149, 128, 64, 4
        $region24: #{tpu_custom_call.1} parent=19 // pred_fallthru
          _
        // Predicated region
        $region25: #{tpu_custom_call.1} parent=19 // pred_check
          %p165 = pneg %p83
        $region26: #{tpu_custom_call.1} parent=19 // pred_check_branch
          %167 = sbr.rel (%p165) target = $region28
        $region27: #{tpu_custom_call.1} parent=19 // pred_region
          %p168 = scmp.lt.s32.totalorder %s16, 1
          %s169 = scalar_select %p168, %s16, 1
          %s170 = scalar_lea.vmem %s2, %s169
        $region28: #{tpu_custom_call.1} parent=19 // pred_fallthru
          _
      $region20: #{tpu_custom_call.1} parent=5 // pred_fallthru
        _
      %p171 = scmp.le.s32.totalorder 1, %s16
      %p172 = scmp.lt.s32.totalorder %s16, 3
      %p173 = pnand %p171, %p172
      %p174 = pneg %p173
      // Predicated region
      $region29: #{tpu_custom_call.1} parent=5 // pred_check
        _
      $region30: #{tpu_custom_call.1} parent=5 // pred_check_branch
        %176 = sbr.rel (%p173) target = $region32
      $region31: #{tpu_custom_call.1} parent=5 // pred_region
        %s177 = ssub.s32 %s16, 1
        // Predicated region
        $region33: #{tpu_custom_call.1} parent=31 // pred_check
          %p178 = pneg %p37
        $region34: #{tpu_custom_call.1} parent=31 // pred_check_branch
          %180 = sbr.rel (%p178) target = $region36
        $region35: #{tpu_custom_call.1} parent=31 // pred_region
          %181 = dma.done [#allocation3], 64
        $region36: #{tpu_custom_call.1} parent=31 // pred_fallthru
          _
        %s182 = sand.u32 %s50, 1
        %s183 = scalar_lea.sflag [#allocation6], %s182
        %s184 = sand.u32 %s50, 1
        %s185 = smul.addr %s184, 16
        %s186 = scalar_lea.vmem [#allocation5], %s185
        // Predicated region
        $region37: #{tpu_custom_call.1} parent=31 // pred_check
          %p187 = pneg %p63
        $region38: #{tpu_custom_call.1} parent=31 // pred_check_branch
          %189 = sbr.rel (%p187) target = $region40
        $region39: #{tpu_custom_call.1} parent=31 // pred_region
          %190 = dma.done %s183, 256
        $region40: #{tpu_custom_call.1} parent=31 // pred_fallthru
          _
        %p191 = pneg %p37
        %p192 = pneg %p34
        %s193 = sand.u32 %s50, 1
        %s194 = scalar_lea.sflag [#allocation6], %s193
        %s195 = sand.u32 %s50, 1
        %s196 = smul.addr %s195, 16
        %s197 = scalar_lea.vmem [#allocation5], %s196
        %p198 = pneg %p63
        %p199 = pneg %p60
        %p200 = scmp.lt.s32.totalorder %s21, 1
        %s201 = scalar_select %p200, %s21, 1
        %s202 = scalar_lea.vmem %s2, %s201
        %p203 = pneg %p89
        %p204 = pneg %p86
        %p205 = pneg %p115
        %p206 = pneg %p112
        %s207 = sand.u32 %s102, 1
        %s208 = scalar_lea.sflag [#allocation4], %s207
        %s209 = sand.u32 %s102, 1
        %s210 = smul.addr %s209, 8
        %s211 = scalar_lea.vmem [#allocation7], %s210
        %p212 = scmp.lt.s32.totalorder %s21, 1
        %s213 = scalar_select %p212, %s21, 1
        %s214 = scalar_lea.vmem %s2, %s213
        %v216 = vld [vmem:[#allocation2] sm:$0xf]
        %v217 = vld [vmem:[%s186] sm:$0xf]
        %v218 = vld [vmem:[%s186 + $0x4] sm:$0xf]
        %v219 = vld [vmem:[%s186 + $0x8] sm:$0xf]
        %v220 = vld [vmem:[%s186 + $0xc] sm:$0xf]
        %v221 = vld [vmem:[%s214] sm:$0x1]
        %v222 = vunpack.c.l.bf16 %v221
        %v223 = vlaneseq
        %v224 = vshrl.u32 %v223, 7
        %v225 = vsub.s32 0, %v224
        %v226 = vrot.slane %v222, %v225
        %v231 = vunpack.c.l.b16 %v217
        %v232 = vunpack.c.l.b16 %v218
        %v233 = vunpack.c.l.b16 %v219
        %v234 = vunpack.c.l.b16 %v220
        %v235 = vpack.c.b16 %v232, %v231
        %v236 = vpack.c.b16 %v234, %v233
        %vm239 = vcmask 261120
        %v241 = vsel %vm239, %v216, 0
        %243 = vmatprep.subr.bf16.mxu0 0
        %244 = vmatpush1.bf16.msra.mxu0 %v235
        %245 = vmatprep.subr.bf16.mxu0 0
        %246 = vmatpush1.bf16.msra.mxu0 %v236
        %247 = vmatprep.subr.bf16.mxu0 0
        %248 = vmatpush1.bf16.msra.mxu0 0
        %249 = vmatprep.subr.bf16.mxu0 0
        %250 = vmatpush1.bf16.msra.mxu0 0
        %251 = vmatprep.subr.bf16.mxu0 0
        %252 = vmatpush1.bf16.msra.mxu0 0
        %253 = vmatprep.subr.bf16.mxu0 0
        %254 = vmatpush1.bf16.msra.mxu0 0
        %255 = vmatprep.subr.bf16.mxu0 0
        %256 = vmatpush1.bf16.msra.mxu0 0
        %257 = vmatprep.subr.bf16.mxu0 0
        %258 = vmatpush1.bf16.msra.mxu0 0
        %259 = vmatprep.subr.bf16.mxu0 0
        %260 = vmatpush1.bf16.msra.mxu0 0
        %261 = vmatprep.subr.bf16.mxu0 0
        %262 = vmatpush1.bf16.msra.mxu0 0
        %263 = vmatprep.subr.bf16.mxu0 0
        %264 = vmatpush1.bf16.msra.mxu0 0
        %265 = vmatprep.subr.bf16.mxu0 0
        %266 = vmatpush1.bf16.msra.mxu0 0
        %267 = vmatprep.subr.bf16.mxu0 0
        %268 = vmatpush1.bf16.msra.mxu0 0
        %269 = vmatprep.subr.bf16.mxu0 0
        %270 = vmatpush1.bf16.msra.mxu0 0
        %271 = vmatprep.subr.bf16.mxu0 0
        %272 = vmatpush1.bf16.msra.mxu0 0
        %273 = vmatprep.subr.bf16.mxu0 0
        %274 = vmatpush1.bf16.msra.mxu0 0
        %275 = vmatprep.mubr.bf16.mxu0 0
        %276 = vmatmul.mubr.bf16.gmra.mrb[0].mxu0 %v241
        %v277 = vpop.f32.mrb[0].mxu0
        %v278 = vadd.f32 %v226, %v277
        %v279 = vpop.f32.mrb[0].mxu0
        %v280 = vpop.f32.mrb[0].mxu0
        %v281 = vpop.f32.mrb[0].mxu0
        %282 = vdwg.mxu0
        %v283 = vtanh.pop %v278
        %284 = vst [vmem:[%s211] sm:$0xff] %v283
        %s285 = sand.u32 %s102, 1
        %s286 = scalar_lea.sflag [#allocation4], %s285
        %s287 = sand.u32 %s102, 1
        %s288 = smul.addr %s287, 8
        %s289 = scalar_lea.vmem [#allocation7], %s288
        // Predicated region
        $region41: #{tpu_custom_call.1} parent=31 // pred_check
          %p290 = pneg %p112
        $region42: #{tpu_custom_call.1} parent=31 // pred_check_branch
          %292 = sbr.rel (%p290) target = $region44
        $region43: #{tpu_custom_call.1} parent=31 // pred_region
          %s294 = ssub.s32 128, 128
          %295 = vsyncadd %s286, %s294
          %s296 = smul.addr %s21, 128
          %s297 = scalar_lea.hbm %s3, %s296
          %s299 = sshll.u32 %s289, 4
          %s300 = int_to_ptr.vmem [resolvable:$true] %s299
          %302 = dma.vmem_to_hbm [thread:$0]  %s300, 128, %s297, %s286
        $region44: #{tpu_custom_call.1} parent=31 // pred_fallthru
          _
      $region32: #{tpu_custom_call.1} parent=5 // pred_fallthru
        _
      %p303 = scmp.le.s32.totalorder 2, %s16
      // Predicated region
      $region45: #{tpu_custom_call.1} parent=5 // pred_check
        %p304 = pneg %p303
      $region46: #{tpu_custom_call.1} parent=5 // pred_check_branch
        %306 = sbr.rel (%p304) target = $region48
      $region47: #{tpu_custom_call.1} parent=5 // pred_region
        %s307 = ssub.s32 %s16, 2
        // Predicated region
        $region49: #{tpu_custom_call.1} parent=47 // pred_check
          %p308 = pneg %p118
        $region50: #{tpu_custom_call.1} parent=47 // pred_check_branch
          %310 = sbr.rel (%p308) target = $region52
        $region51: #{tpu_custom_call.1} parent=47 // pred_region
          %s311 = sand.u32 %s103, 1
          %s312 = scalar_lea.sflag [#allocation4], %s311
          %s313 = sand.u32 %s103, 1
          %s314 = smul.addr %s313, 8
          %s315 = scalar_lea.vmem [#allocation7], %s314
          %316 = dma.done %s312, 128
        $region52: #{tpu_custom_call.1} parent=47 // pred_fallthru
          _
      $region48: #{tpu_custom_call.1} parent=5 // pred_fallthru
        _
    $region6: #{tpu_custom_call.1} parent=1 // loop_footer
      %s20 = sadd.s32 1, %s16
    $region7: #{tpu_custom_call.1} parent=1 // loop_footer_branch
      %15 = sbr.rel target = $region3
    $region8: #{tpu_custom_call.1} parent=1 // loop_exit
      _
    %317 = vsyncpa [#allocation3], 1
    %s318 = scalar_lea.sflag [#allocation3], 1
    %319 = vsyncpa %s318, 1
    %320 = vsyncpa [#allocation6], 1
    %s321 = scalar_lea.sflag [#allocation6], 1
    %322 = vsyncpa %s321, 1
    %323 = vsyncpa [#allocation4], 1
    %s324 = scalar_lea.sflag [#allocation4], 1
    %325 = vsyncpa %s324, 1

// kernel: tpu_custom_call.1
$region0: #{tpu_custom_call.1}
  #allocation0 [shape = 'u32[]', space=smem, size = 0x4, offset = 0x4, fixed_abs, tag = 'smem constant byte address 0x4 - core index']
  #allocation1 [shape = 'u32[144,128]{1,0:T(1,128)}', space=vmem, size = 0x12000, scoped, tag = 'internal scratch']
  %s0 = inlined_call_operand.hbm [shape: bf16[8,32], index: 0, kind: input, shape index: {}]
  %s1 = inlined_call_operand.hbm [shape: bf16[32,256], index: 1, kind: input, shape index: {}]
  %s2 = inlined_call_operand.vmem [shape: bf16[1,256], index: 2, kind: input, shape index: {}]
  %s3 = inlined_call_operand.hbm [shape: f32[8,256], index: 3, kind: output, shape index: {}]
  %s4 = sld [smem:[#allocation0]]
  $region53: #{tpu_custom_call.1} parent=0
    _
  %s6 = ssub.s32 1, %s4
  %s7 = scalar_select 0, %s6, %s4
  $region1: #{tpu_custom_call.1} parent=0
    #allocation2 [shape = 'u8[2048]{0}', space=vmem, size = 0x800, scoped, tag = 'input window, operand 0, single buffered']
    #allocation3 [shape = 's32[2]{0}', space=sflag, size = 0x8, scoped, tag = 'scoped memory for tpu_custom_call.1']
    #allocation4 [shape = 's32[2]{0}', space=sflag, size = 0x8, scoped, tag = 'scoped memory for tpu_custom_call.1']
    #allocation5 [shape = 'u8[16384]{0}', space=vmem, size = 0x4000, scoped, tag = 'input window, operand 1']
    #allocation6 [shape = 's32[2]{0}', space=sflag, size = 0x8, scoped, tag = 'scoped memory for tpu_custom_call.1']
    #allocation7 [shape = 'u8[8192]{0}', space=vmem, size = 0x2000, scoped, tag = 'output window, operand 0']
    %8 = vsyncpa [#allocation3], 0
    %9 = vsyncpa [#allocation6], 0
    %s10 = scalar_lea.sflag [#allocation6], 1
    %11 = vsyncpa %s10, 0
    %12 = vsyncpa [#allocation4], 0
    %s13 = scalar_lea.sflag [#allocation4], 1
    %14 = vsyncpa %s13, 0
    loop: start=0, step=1, limit=4
    $region2: #{tpu_custom_call.1} parent=1 // loop_pre_header
      _
    $region3: #{tpu_custom_call.1} parent=1 // loop_header
      %s16 = sphi 0, %s20
      %p17 = scmp.ge.s32.totalorder %s16, 4
      %s24 = sphi 0, %s24
      %s26 = sphi 0, %s24
      %s27 = sphi 0, %s26
      %s41 = sphi 0, %s27
      %s47 = sphi 0, %s49
      %s50 = sphi 0, %s47
      %s51 = sphi 0, %s50
      %s67 = sphi 0, %s51
      %s73 = sphi 0, %s75
      %s76 = sphi 0, %s73
      %s77 = sphi 0, %s76
      %s93 = sphi 0, %s77
      %s99 = sphi 0, %s101
      %s102 = sphi 0, %s99
      %s103 = sphi 0, %s102
      %s119 = sphi 0, %s103
    $region4: #{tpu_custom_call.1} parent=1 // loop_header_branch
      %19 = sbr.rel (%p17) target = $region8
    $region5: #{tpu_custom_call.1} parent=1 // loop_body
      %s21 = ssub.s32 %s16, 1
      %s22 = ssub.s32 %s16, 2
      %s23 = sadd.s32 %s16, 1
      %s25 = sadd.s32 %s24, 1
      %p28 = scmp.eq.s32.totalorder %s16, 1
      %p29 = scmp.ne.s32.totalorder %s24, %s26
      %p30 = scmp.eq.s32.totalorder %s16, 0
      %p31 = por %p29, %p30
      %p32 = scmp.ne.s32.totalorder %s24, %s26
      %p33 = scmp.eq.s32.totalorder %s21, 1
      %p34 = por %p32, %p33
      %p35 = scmp.ne.s32.totalorder %s26, %s27
      %p36 = scmp.eq.s32.totalorder %s21, 0
      %p37 = por %p35, %p36
      %p38 = scmp.ne.s32.totalorder %s26, %s27
      %p39 = scmp.eq.s32.totalorder %s22, 1
      %p40 = por %p38, %p39
      %p42 = scmp.ne.s32.totalorder %s27, %s41
      %p43 = scmp.eq.s32.totalorder %s22, 0
      %p44 = por %p42, %p43
      %s45 = ssub.s32 %s16, %s23
      %p46 = scmp.eq.s32.totalorder %s45, 0
      %s48 = sadd.s32 %s47, 1
      %s49 = scalar_select %p46, %s47, %s48
      %p52 = pneg %p46
      %p53 = scmp.eq.s32.totalorder %s16, 1
      %p54 = por %p52, %p53
      %p55 = scmp.ne.s32.totalorder %s47, %s50
      %p56 = scmp.eq.s32.totalorder %s16, 0
      %p57 = por %p55, %p56
      %p58 = scmp.ne.s32.totalorder %s47, %s50
      %p59 = scmp.eq.s32.totalorder %s21, 1
      %p60 = por %p58, %p59
      %p61 = scmp.ne.s32.totalorder %s50, %s51
      %p62 = scmp.eq.s32.totalorder %s21, 0
      %p63 = por %p61, %p62
      %p64 = scmp.ne.s32.totalorder %s50, %s51
      %p65 = scmp.eq.s32.totalorder %s22, 1
      %p66 = por %p64, %p65
      %p68 = scmp.ne.s32.totalorder %s51, %s67
      %p69 = scmp.eq.s32.totalorder %s22, 0
      %p70 = por %p68, %p69
      %s71 = ssub.s32 %s16, %s23
      %p72 = scmp.eq.s32.totalorder %s71, 0
      %s74 = sadd.s32 %s73, 1
      %s75 = scalar_select %p72, %s73, %s74
      %p78 = pneg %p72
      %p79 = scmp.eq.s32.totalorder %s16, 1
      %p80 = por %p78, %p79
      %p81 = scmp.ne.s32.totalorder %s73, %s76
      %p82 = scmp.eq.s32.totalorder %s16, 0
      %p83 = por %p81, %p82
      %p84 = scmp.ne.s32.totalorder %s73, %s76
      %p85 = scmp.eq.s32.totalorder %s21, 1
      %p86 = por %p84, %p85
      %p87 = scmp.ne.s32.totalorder %s76, %s77
      %p88 = scmp.eq.s32.totalorder %s21, 0
      %p89 = por %p87, %p88
      %p90 = scmp.ne.s32.totalorder %s76, %s77
      %p91 = scmp.eq.s32.totalorder %s22, 1
      %p92 = por %p90, %p91
      %p94 = scmp.ne.s32.totalorder %s77, %s93
      %p95 = scmp.eq.s32.totalorder %s22, 0
      %p96 = por %p94, %p95
      %s97 = ssub.s32 %s16, %s23
      %p98 = scmp.eq.s32.totalorder %s97, 0
      %s100 = sadd.s32 %s99, 1
      %s101 = scalar_select %p98, %s99, %s100
      %p104 = pneg %p98
      %p105 = scmp.eq.s32.totalorder %s16, 1
      %p106 = por %p104, %p105
      %p107 = scmp.ne.s32.totalorder %s99, %s102
      %p108 = scmp.eq.s32.totalorder %s16, 0
      %p109 = por %p107, %p108
      %p110 = scmp.ne.s32.totalorder %s99, %s102
      %p111 = scmp.eq.s32.totalorder %s21, 1
      %p112 = por %p110, %p111
      %p113 = scmp.ne.s32.totalorder %s102, %s103
      %p114 = scmp.eq.s32.totalorder %s21, 0
      %p115 = por %p113, %p114
      %p116 = scmp.ne.s32.totalorder %s102, %s103
      %p117 = scmp.eq.s32.totalorder %s22, 1
      %p118 = por %p116, %p117
      %p120 = scmp.ne.s32.totalorder %s103, %s119
      %p121 = scmp.eq.s32.totalorder %s22, 0
      %p122 = por %p120, %p121
      %p123 = scmp.le.s32.totalorder 1, %s16
      %p124 = scmp.lt.s32.totalorder %s16, 3
      %p125 = pnand %p123, %p124
      %p126 = pneg %p125
      // Predicated region
      $region9: #{tpu_custom_call.1} parent=5 // pred_check
        _
      $region10: #{tpu_custom_call.1} parent=5 // pred_check_branch
        %128 = sbr.rel (%p125) target = $region12
      $region11: #{tpu_custom_call.1} parent=5 // pred_region
        %s129 = ssub.s32 %s16, 1
        // Predicated region
        $region13: #{tpu_custom_call.1} parent=11 // pred_check
          %p130 = pneg %p37
        $region14: #{tpu_custom_call.1} parent=11 // pred_check_branch
          %132 = sbr.rel (%p130) target = $region16
        $region15: #{tpu_custom_call.1} parent=11 // pred_region
          %s134 = ssub.s32 64, 64
          %135 = vsyncadd [#allocation3], %s134
          %s137 = sshll.u32 [#allocation2], 4
          %s138 = int_to_ptr.vmem [resolvable:$true] %s137
          %140 = dma.hbm_to_vmem [thread:$0]  %s0, 64, %s138, [#allocation3]
        $region16: #{tpu_custom_call.1} parent=11 // pred_fallthru
          _
      $region12: #{tpu_custom_call.1} parent=5 // pred_fallthru
        _
      %p141 = scmp.lt.s32.totalorder %s16, 2
      // Predicated region
      $region17: #{tpu_custom_call.1} parent=5 // pred_check
        %p142 = pneg %p141
      $region18: #{tpu_custom_call.1} parent=5 // pred_check_branch
        %144 = sbr.rel (%p142) target = $region20
      $region19: #{tpu_custom_call.1} parent=5 // pred_region
        // Predicated region
        $region21: #{tpu_custom_call.1} parent=19 // pred_check
          %p145 = pneg %p57
        $region22: #{tpu_custom_call.1} parent=19 // pred_check_branch
          %147 = sbr.rel (%p145) target = $region24
        $region23: #{tpu_custom_call.1} parent=19 // pred_region
          %s148 = sand.u32 %s47, 1
          %s149 = scalar_lea.sflag [#allocation6], %s148
          %s150 = sand.u32 %s47, 1
          %s151 = smul.addr %s150, 16
          %s152 = scalar_lea.vmem [#allocation5], %s151
          %s154 = ssub.s32 256, 256
          %155 = vsyncadd %s149, %s154
          %s156 = smul.addr %s16, 64
          %s157 = scalar_lea.hbm %s1, %s156
          %s158 = sshll.u32 %s152, 4
          %s159 = int_to_ptr.vmem [resolvable:$true] %s158
          %164 = dma.hbm_to_vmem [thread:$0]  %s157, 256, %s159, %s149, 128, 64, 4
        $region24: #{tpu_custom_call.1} parent=19 // pred_fallthru
          _
        // Predicated region
        $region25: #{tpu_custom_call.1} parent=19 // pred_check
          %p165 = pneg %p83
        $region26: #{tpu_custom_call.1} parent=19 // pred_check_branch
          %167 = sbr.rel (%p165) target = $region28
        $region27: #{tpu_custom_call.1} parent=19 // pred_region
          %p168 = scmp.lt.s32.totalorder %s16, 1
          %s169 = scalar_select %p168, %s16, 1
          %s170 = scalar_lea.vmem %s2, %s169
        $region28: #{tpu_custom_call.1} parent=19 // pred_fallthru
          _
      $region20: #{tpu_custom_call.1} parent=5 // pred_fallthru
        _
      %p171 = scmp.le.s32.totalorder 1, %s16
      %p172 = scmp.lt.s32.totalorder %s16, 3
      %p173 = pnand %p171, %p172
      %p174 = pneg %p173
      // Predicated region
      $region29: #{tpu_custom_call.1} parent=5 // pred_check
        _
      $region30: #{tpu_custom_call.1} parent=5 // pred_check_branch
        %176 = sbr.rel (%p173) target = $region32
      $region31: #{tpu_custom_call.1} parent=5 // pred_region
        %s177 = ssub.s32 %s16, 1
        // Predicated region
        $region33: #{tpu_custom_call.1} parent=31 // pred_check
          %p178 = pneg %p37
        $region34: #{tpu_custom_call.1} parent=31 // pred_check_branch
          %180 = sbr.rel (%p178) target = $region36
        $region35: #{tpu_custom_call.1} parent=31 // pred_region
          %181 = dma.done [#allocation3], 64
        $region36: #{tpu_custom_call.1} parent=31 // pred_fallthru
          _
        %s182 = sand.u32 %s50, 1
        %s183 = scalar_lea.sflag [#allocation6], %s182
        %s184 = sand.u32 %s50, 1
        %s185 = smul.addr %s184, 16
        %s186 = scalar_lea.vmem [#allocation5], %s185
        // Predicated region
        $region37: #{tpu_custom_call.1} parent=31 // pred_check
          %p187 = pneg %p63
        $region38: #{tpu_custom_call.1} parent=31 // pred_check_branch
          %189 = sbr.rel (%p187) target = $region40
        $region39: #{tpu_custom_call.1} parent=31 // pred_region
          %190 = dma.done %s183, 256
        $region40: #{tpu_custom_call.1} parent=31 // pred_fallthru
          _
        %p191 = pneg %p37
        %p192 = pneg %p34
        %s193 = sand.u32 %s50, 1
        %s194 = scalar_lea.sflag [#allocation6], %s193
        %s195 = sand.u32 %s50, 1
        %s196 = smul.addr %s195, 16
        %s197 = scalar_lea.vmem [#allocation5], %s196
        %p198 = pneg %p63
        %p199 = pneg %p60
        %p200 = scmp.lt.s32.totalorder %s21, 1
        %s201 = scalar_select %p200, %s21, 1
        %s202 = scalar_lea.vmem %s2, %s201
        %p203 = pneg %p89
        %p204 = pneg %p86
        %p205 = pneg %p115
        %p206 = pneg %p112
        %s207 = sand.u32 %s102, 1
        %s208 = scalar_lea.sflag [#allocation4], %s207
        %s209 = sand.u32 %s102, 1
        %s210 = smul.addr %s209, 8
        %s211 = scalar_lea.vmem [#allocation7], %s210
        %p212 = scmp.lt.s32.totalorder %s21, 1
        %s213 = scalar_select %p212, %s21, 1
        %s214 = scalar_lea.vmem %s2, %s213
        %v216 = vld [vmem:[#allocation2] sm:$0xf]
        %v217 = vld [vmem:[%s186] sm:$0xf]
        %v218 = vld [vmem:[%s186 + $0x4] sm:$0xf]
        %v219 = vld [vmem:[%s186 + $0x8] sm:$0xf]
        %v220 = vld [vmem:[%s186 + $0xc] sm:$0xf]
        %v221 = vld [vmem:[%s214] sm:$0x1]
        %v222 = vunpack.c.l.bf16 %v221
        %v223 = vlaneseq
        %v224 = vshrl.u32 %v223, 7
        %v225 = vsub.s32 0, %v224
        %v226 = vrot.slane %v222, %v225
        %v231 = vunpack.c.l.b16 %v217
        %v232 = vunpack.c.l.b16 %v218
        %v233 = vunpack.c.l.b16 %v219
        %v234 = vunpack.c.l.b16 %v220
        %v235 = vpack.c.b16 %v232, %v231
        %v236 = vpack.c.b16 %v234, %v233
        %vm239 = vcmask 261120
        %v241 = vsel %vm239, %v216, 0
        %243 = vmatprep.subr.bf16.mxu0 0
        %244 = vmatpush1.bf16.msra.mxu0 %v235
        %245 = vmatprep.subr.bf16.mxu0 0
        %246 = vmatpush1.bf16.msra.mxu0 %v236
        %247 = vmatprep.subr.bf16.mxu0 0
        %248 = vmatpush1.bf16.msra.mxu0 0
        %249 = vmatprep.subr.bf16.mxu0 0
        %250 = vmatpush1.bf16.msra.mxu0 0
        %251 = vmatprep.subr.bf16.mxu0 0
        %252 = vmatpush1.bf16.msra.mxu0 0
        %253 = vmatprep.subr.bf16.mxu0 0
        %254 = vmatpush1.bf16.msra.mxu0 0
        %255 = vmatprep.subr.bf16.mxu0 0
        %256 = vmatpush1.bf16.msra.mxu0 0
        %257 = vmatprep.subr.bf16.mxu0 0
        %258 = vmatpush1.bf16.msra.mxu0 0
        %259 = vmatprep.subr.bf16.mxu0 0
        %260 = vmatpush1.bf16.msra.mxu0 0
        %261 = vmatprep.subr.bf16.mxu0 0
        %262 = vmatpush1.bf16.msra.mxu0 0
        %263 = vmatprep.subr.bf16.mxu0 0
        %264 = vmatpush1.bf16.msra.mxu0 0
        %265 = vmatprep.subr.bf16.mxu0 0
        %266 = vmatpush1.bf16.msra.mxu0 0
        %267 = vmatprep.subr.bf16.mxu0 0
        %268 = vmatpush1.bf16.msra.mxu0 0
        %269 = vmatprep.subr.bf16.mxu0 0
        %270 = vmatpush1.bf16.msra.mxu0 0
        %271 = vmatprep.subr.bf16.mxu0 0
        %272 = vmatpush1.bf16.msra.mxu0 0
        %273 = vmatprep.subr.bf16.mxu0 0
        %274 = vmatpush1.bf16.msra.mxu0 0
        %275 = vmatprep.mubr.bf16.mxu0 0
        %276 = vmatmul.mubr.bf16.gmra.mrb[0].mxu0 %v241
        %v277 = vpop.f32.mrb[0].mxu0
        %v278 = vadd.f32 %v226, %v277
        %v279 = vpop.f32.mrb[0].mxu0
        %v280 = vpop.f32.mrb[0].mxu0
        %v281 = vpop.f32.mrb[0].mxu0
        %282 = vdwg.mxu0
        %v283 = vtanh.pop %v278
        %284 = vst [vmem:[%s211] sm:$0xff] %v283
        %s285 = sand.u32 %s102, 1
        %s286 = scalar_lea.sflag [#allocation4], %s285
        %s287 = sand.u32 %s102, 1
        %s288 = smul.addr %s287, 8
        %s289 = scalar_lea.vmem [#allocation7], %s288
        // Predicated region
        $region41: #{tpu_custom_call.1} parent=31 // pred_check
          %p290 = pneg %p112
        $region42: #{tpu_custom_call.1} parent=31 // pred_check_branch
          %292 = sbr.rel (%p290) target = $region44
        $region43: #{tpu_custom_call.1} parent=31 // pred_region
          %s294 = ssub.s32 128, 128
          %295 = vsyncadd %s286, %s294
          %s296 = smul.addr %s21, 128
          %s297 = scalar_lea.hbm %s3, %s296
          %s299 = sshll.u32 %s289, 4
          %s300 = int_to_ptr.vmem [resolvable:$true] %s299
          %302 = dma.vmem_to_hbm [thread:$0]  %s300, 128, %s297, %s286
        $region44: #{tpu_custom_call.1} parent=31 // pred_fallthru
          _
      $region32: #{tpu_custom_call.1} parent=5 // pred_fallthru
        _
      %p303 = scmp.le.s32.totalorder 2, %s16
      // Predicated region
      $region45: #{tpu_custom_call.1} parent=5 // pred_check
        %p304 = pneg %p303
      $region46: #{tpu_custom_call.1} parent=5 // pred_check_branch
        %306 = sbr.rel (%p304) target = $region48
      $region47: #{tpu_custom_call.1} parent=5 // pred_region
        %s307 = ssub.s32 %s16, 2
        // Predicated region
        $region49: #{tpu_custom_call.1} parent=47 // pred_check
          %p308 = pneg %p118
        $region50: #{tpu_custom_call.1} parent=47 // pred_check_branch
          %310 = sbr.rel (%p308) target = $region52
        $region51: #{tpu_custom_call.1} parent=47 // pred_region
          %s311 = sand.u32 %s103, 1
          %s312 = scalar_lea.sflag [#allocation4], %s311
          %s313 = sand.u32 %s103, 1
          %s314 = smul.addr %s313, 8
          %s315 = scalar_lea.vmem [#allocation7], %s314
          %316 = dma.done %s312, 128
        $region52: #{tpu_custom_call.1} parent=47 // pred_fallthru
          _
      $region48: #{tpu_custom_call.1} parent=5 // pred_fallthru
        _
    $region6: #{tpu_custom_call.1} parent=1 // loop_footer
      %s20 = sadd.s32 1, %s16
    $region7: #{tpu_custom_call.1} parent=1 // loop_footer_branch
      %15 = sbr.rel target = $region3
    $region8: #{tpu_custom_call.1} parent=1 // loop_exit
      _
    %317 = vsyncpa [#allocation3], 1
    %s318 = scalar_lea.sflag [#allocation3], 1
    %319 = vsyncpa %s318, 1
    %320 = vsyncpa [#allocation6], 1
    %s321 = scalar_lea.sflag [#allocation6], 1
    %322 = vsyncpa %s321, 1
    %323 = vsyncpa [#allocation4], 1
    %s324 = scalar_lea.sflag [#allocation4], 1
    %325 = vsyncpa %s324, 1

</llo_original>
